<compile_context>
chip_gen: v5e
topology: v5e:2x2
jax: 0.10.0
libtpu: 0.0.40
codegen_flags: <defaults>
</compile_context>

<pallas_src>
import jax
import jax.numpy as jnp
from jax import lax
from jax.experimental import pallas as pl
from jax.experimental.pallas import tpu as pltpu


def _round_up(x, m):
    return ((x + m - 1) // m) * m


def sae_kernel(x_ref, w_ref, b_ref, dec_ref, enc_ref, acc_ref):
    # x_ref:   (TB, d_in_p)   bf16 input tile (resident across j)
    # w_ref:   (TS, d_in_p)   bf16 W_enc tile -- the ONLY weight stream
    # b_ref:   (1, TS)        f32 bias tile
    # dec_ref: (TB, d_in_p)   f32 decoded output (resident across j)
    # enc_ref: (TB, TS)       f32 encoded output tile
    # acc_ref: (TB, d_in_p)   f32 decoder accumulator (VMEM scratch)
    j = pl.program_id(1)

    @pl.when(j == 0)
    def _():
        acc_ref[...] = jnp.zeros_like(acc_ref)

    # Encoder: x @ W.T as a transposed-RHS contraction on the shared W tile.
    # (TB, d_in_p) x (TS, d_in_p) contracting dim 1 of both -> (TB, TS), f32 acc.
    pre = lax.dot_general(
        x_ref[...], w_ref[...],
        dimension_numbers=(((1,), (1,)), ((), ())),
        preferred_element_type=jnp.float32)
    enc = jnp.maximum(pre + b_ref[...], 0.0)
    enc_ref[...] = enc.astype(enc_ref.dtype)

    # Decoder (tied weights): accumulate (TB, TS) @ (TS, d_in_p) over j.
    acc_ref[...] += jnp.dot(enc.astype(jnp.bfloat16), w_ref[...],
                            preferred_element_type=jnp.float32)

    @pl.when(j == pl.num_programs(1) - 1)
    def _():
        dec_ref[...] = acc_ref[...].astype(dec_ref.dtype)


def _vmem_footprint(TB, TS, d_in_p):
    """Approximate VMEM bytes for one grid step (double-buffered) + scratch."""
    per_step = (TB * d_in_p * 2      # x tile (bf16)
                + TS * d_in_p * 2    # W tile (bf16)
                + 8 * TS * 4         # bias tile (padded to 8 sublanes)
                + TB * d_in_p * 4    # decoded out tile (f32)
                + TB * TS * 4)       # encoded out tile (f32)
    return 2 * per_step + TB * d_in_p * 4   # double-buffer + f32 accumulator


def simple_sae_forward(x, w_enc, b_enc, *, tb=None, ts=None):
    """Pallas SimpleSAE forward. Returns (decoded, encoded) in float32."""
    B, d_in = x.shape
    d_sae = w_enc.shape[0]
    f32, bf16 = jnp.float32, jnp.bfloat16

    # Lane-dense padded dims (multiple of 128 on the lane axis).
    d_in_p = _round_up(max(d_in, 128), 128)
    d_sae_p = _round_up(max(d_sae, 128), 128)

    # Physical VMEM budget: ~85% of capacity (leaves Mosaic headroom).
    try:
        vmem_cap = int(pltpu.get_tpu_info().vmem_capacity_bytes)
    except Exception:
        vmem_cap = 64 << 20          # conservative (v7x per-TC)
    cap = int(0.85 * vmem_cap)

    # Batch tile: big tiles for big batches (fewer weight re-streams); small
    # batches split into >= 2 tiles so the parallel axis feeds both v7x TCs.
    if tb is None:
        B8 = _round_up(max(B, 8), 8)
        if B8 >= 1024:
            TB = 512
        elif B8 >= 16:
            TB = _round_up(B8 // 2, 8)
        else:
            TB = 8
    else:
        TB = tb
    B_p = _round_up(max(B, TB), TB)

    # d_sae tile: largest candidate that fits the VMEM budget (4096 on
    # 128-MiB-VMEM chips like v6e, typically 2048 on v7x).
    if ts is None:
        TS = 128
        for cand in (4096, 2048, 1024, 512, 256, 128):
            if cand <= d_sae_p and _vmem_footprint(TB, cand, d_in_p) + (4 << 20) <= cap:
                TS = cand
                break
    else:
        TS = ts
    TS = min(TS, d_sae_p)
    d_sae_p = _round_up(d_sae_p, TS)

    # Pad + cast once in HBM (XLA side). bf16 operands for the MXU.
    x_p = jnp.zeros((B_p, d_in_p), bf16).at[:B, :d_in].set(x.astype(bf16))
    w_p = jnp.zeros((d_sae_p, d_in_p), bf16).at[:d_sae, :d_in].set(
        w_enc.astype(bf16))
    b_p = jnp.zeros((1, d_sae_p), f32).at[0, :d_sae].set(b_enc.astype(f32))

    grid = (B_p // TB, d_sae_p // TS)

    tile_bytes = _vmem_footprint(TB, TS, d_in_p)
    vmem_limit = int(min(cap, max(tile_bytes + (4 << 20), 32 << 20)))

    flops = 4 * B_p * d_in_p * d_sae_p          # two matmuls, 2 flops / MAC
    bytes_accessed = (x_p.size * 2
                      + w_p.size * 2 * grid[0]  # single W layout, per batch tile
                      + b_p.size * 4
                      + B_p * d_sae_p * 4       # encoded out (f32)
                      + B_p * d_in_p * 4)       # decoded out (f32)

    decoded, encoded = pl.pallas_call(
        sae_kernel,
        out_shape=(
            jax.ShapeDtypeStruct((B_p, d_in_p), f32),
            jax.ShapeDtypeStruct((B_p, d_sae_p), f32),
        ),
        grid_spec=pltpu.PrefetchScalarGridSpec(
            num_scalar_prefetch=0,
            grid=grid,
            in_specs=[
                pl.BlockSpec((TB, d_in_p), lambda i, j: (i, 0)),    # x
                pl.BlockSpec((TS, d_in_p), lambda i, j: (j, 0)),    # W (single layout)
                pl.BlockSpec((1, TS), lambda i, j: (0, j)),         # bias
            ],
            out_specs=(
                pl.BlockSpec((TB, d_in_p), lambda i, j: (i, 0)),    # decoded
                pl.BlockSpec((TB, TS), lambda i, j: (i, j)),        # encoded
            ),
            scratch_shapes=[pltpu.VMEM((TB, d_in_p), f32)],
        ),
        compiler_params=pltpu.CompilerParams(
            dimension_semantics=("parallel", "arbitrary"),
            vmem_limit_bytes=vmem_limit,
        ),
        cost_estimate=pl.CostEstimate(
            flops=flops, transcendentals=0, bytes_accessed=bytes_accessed),
    )(x_p, w_p, b_p)

    # Slice padding off before returning.
    return decoded[:B, :d_in], encoded[:B, :d_sae]


if __name__ == "__main__":
    # Small shapes consistent with the module: d_in = 32, sae_expansion = 8
    # -> d_sae = 256, batch = 16 (CONFIG['batch_size']).
    B, d_in = 16, 32
    d_sae = d_in * 8

    key = jax.random.PRNGKey(0)
    kx, kw, kb = jax.random.split(key, 3)

    x = jax.random.normal(kx, (B, d_in), dtype=jnp.float32)
    bound = 1.0 / (d_in ** 0.5)
    w_enc = jax.random.uniform(kw, (d_sae, d_in), minval=-bound, maxval=bound,
                               dtype=jnp.float32)
    b_enc = jax.random.uniform(kb, (d_sae,), minval=-bound, maxval=bound,
                               dtype=jnp.float32)

    decoded, encoded = jax.jit(simple_sae_forward)(x, w_enc, b_enc)
    jax.block_until_ready((decoded, encoded))

    assert decoded.shape == (B, d_in) and encoded.shape == (B, d_sae)

    # Reference with matching bf16 operand precision (f32 accumulation).
    xb = x.astype(jnp.bfloat16)
    wb = w_enc.astype(jnp.bfloat16)
    enc_ref = jnp.maximum(
        jnp.dot(xb, wb.T, preferred_element_type=jnp.float32) + b_enc, 0.0)
    dec_ref = jnp.dot(enc_ref.astype(jnp.bfloat16), wb,
                      preferred_element_type=jnp.float32)
    assert jnp.allclose(encoded, enc_ref, atol=1e-2, rtol=1e-2)
    assert jnp.allclose(decoded, dec_ref, atol=1e-2, rtol=1e-2)

    # Loose sanity check against the full-f32 PyTorch-equivalent reference
    # (bf16 MXU operands loosen the tolerance).
    enc_f32 = jnp.maximum(x @ w_enc.T + b_enc, 0.0)
    dec_f32 = enc_f32 @ w_enc
    assert jnp.allclose(encoded, enc_f32, atol=8e-2, rtol=8e-2)
    assert jnp.allclose(decoded, dec_f32, atol=8e-2, rtol=8e-2)

    print("KERNEL_OK")
</pallas_src>

<mosaic_0001>
module attributes {stable_mosaic.version = 11 : i64} {
  func.func @sae_kernel(%arg0: i32, %arg1: i32, %arg2: memref<8x128xbf16, #tpu.memory_space<vmem>>, %arg3: memref<256x128xbf16, #tpu.memory_space<vmem>>, %arg4: memref<1x256xf32, #tpu.memory_space<vmem>>, %arg5: memref<8x128xf32, #tpu.memory_space<vmem>>, %arg6: memref<8x256xf32, #tpu.memory_space<vmem>>, %arg7: memref<8x128xf32, #tpu.memory_space<vmem>>) attributes {dimension_semantics = [#tpu.dimension_semantics<parallel>, #tpu.dimension_semantics<arbitrary>], iteration_bounds = array<i64: 2, 1>, scalar_prefetch = 0 : i64, scratch_operands = 1 : i64, tpu.core_type = #tpu.core_type<tc>, window_params = [{transform_indices = @transform_0, window_bounds = array<i64: 8, 128>}, {transform_indices = @transform_1, window_bounds = array<i64: 256, 128>}, {transform_indices = @transform_2, window_bounds = array<i64: 1, 256>}, {transform_indices = @transform_3, window_bounds = array<i64: 8, 128>}, {transform_indices = @transform_4, window_bounds = array<i64: 8, 256>}]} {
    %c0_i32 = arith.constant 0 : i32
    %0 = arith.cmpi eq, %arg1, %c0_i32 : i32
    %1 = arith.extui %0 : i1 to i32
    %c0_i32_0 = arith.constant 0 : i32
    %2 = arith.cmpi ne, %1, %c0_i32_0 : i32
    scf.if %2 {
      %cst_18 = arith.constant 0.000000e+00 : f32
      %21 = vector.broadcast %cst_18 : f32 to vector<8x128xf32>
      %c0_19 = arith.constant 0 : index
      %c0_20 = arith.constant 0 : index
      %22 = vector.load %arg7[%c0_19, %c0_20] : memref<8x128xf32, #tpu.memory_space<vmem>>, vector<8x128xf32>
      tpu.vector_store %arg7[%c0_19, %c0_20], %21 {strides = array<i32>} : memref<8x128xf32, #tpu.memory_space<vmem>>, vector<8x128xf32>,
    } else {
    }
    %c0 = arith.constant 0 : index
    %c0_1 = arith.constant 0 : index
    %3 = vector.load %arg2[%c0, %c0_1] : memref<8x128xbf16, #tpu.memory_space<vmem>>, vector<8x128xbf16>
    %c0_2 = arith.constant 0 : index
    %c0_3 = arith.constant 0 : index
    %4 = vector.load %arg3[%c0_2, %c0_3] : memref<256x128xbf16, #tpu.memory_space<vmem>>, vector<256x128xbf16>
    %cst = arith.constant dense<0.000000e+00> : vector<8x256xf32>
    %5 = tpu.matmul %3, %4, %cst {dimension_numbers = #tpu.dot_dimension_numbers<[1], [1], [0], [0], [0, 0, 1, 0], [], []>} : vector<8x128xbf16>, vector<256x128xbf16>, vector<8x256xf32> -> vector<8x256xf32>
    %c0_4 = arith.constant 0 : index
    %c0_5 = arith.constant 0 : index
    %6 = vector.load %arg4[%c0_4, %c0_5] : memref<1x256xf32, #tpu.memory_space<vmem>>, vector<1x256xf32>
    %7 = vector.broadcast %6 : vector<1x256xf32> to vector<8x256xf32>
    %8 = arith.addf %5, %7 : vector<8x256xf32>
    %cst_6 = arith.constant 0.000000e+00 : f32
    %9 = vector.broadcast %cst_6 : f32 to vector<8x256xf32>
    %10 = arith.maximumf %8, %9 : vector<8x256xf32>
    %c0_7 = arith.constant 0 : index
    %c0_8 = arith.constant 0 : index
    %11 = vector.load %arg6[%c0_7, %c0_8] : memref<8x256xf32, #tpu.memory_space<vmem>>, vector<8x256xf32>
    tpu.vector_store %arg6[%c0_7, %c0_8], %10 {strides = array<i32>} : memref<8x256xf32, #tpu.memory_space<vmem>>, vector<8x256xf32>,
    %c0_9 = arith.constant 0 : index
    %c0_10 = arith.constant 0 : index
    %12 = vector.load %arg7[%c0_9, %c0_10] : memref<8x128xf32, #tpu.memory_space<vmem>>, vector<8x128xf32>
    %13 = arith.truncf %10 : vector<8x256xf32> to vector<8x256xbf16>
    %c0_11 = arith.constant 0 : index
    %c0_12 = arith.constant 0 : index
    %14 = vector.load %arg3[%c0_11, %c0_12] : memref<256x128xbf16, #tpu.memory_space<vmem>>, vector<256x128xbf16>
    %cst_13 = arith.constant dense<0.000000e+00> : vector<8x128xf32>
    %15 = tpu.matmul %13, %14, %cst_13 {dimension_numbers = #tpu.dot_dimension_numbers<[1], [0], [0], [1], [0, 0, 1, 1], [], []>} : vector<8x256xbf16>, vector<256x128xbf16>, vector<8x128xf32> -> vector<8x128xf32>
    %16 = arith.addf %12, %15 : vector<8x128xf32>
    %c0_14 = arith.constant 0 : index
    %c0_15 = arith.constant 0 : index
    %17 = vector.load %arg7[%c0_14, %c0_15] : memref<8x128xf32, #tpu.memory_space<vmem>>, vector<8x128xf32>
    tpu.vector_store %arg7[%c0_14, %c0_15], %16 {strides = array<i32>} : memref<8x128xf32, #tpu.memory_space<vmem>>, vector<8x128xf32>,
    %c0_i32_16 = arith.constant 0 : i32
    %18 = arith.cmpi eq, %arg1, %c0_i32_16 : i32
    %19 = arith.extui %18 : i1 to i32
    %c0_i32_17 = arith.constant 0 : i32
    %20 = arith.cmpi ne, %19, %c0_i32_17 : i32
    scf.if %20 {
      %c0_18 = arith.constant 0 : index
      %c0_19 = arith.constant 0 : index
      %21 = vector.load %arg7[%c0_18, %c0_19] : memref<8x128xf32, #tpu.memory_space<vmem>>, vector<8x128xf32>
      %c0_20 = arith.constant 0 : index
      %c0_21 = arith.constant 0 : index
      %22 = vector.load %arg5[%c0_20, %c0_21] : memref<8x128xf32, #tpu.memory_space<vmem>>, vector<8x128xf32>
      tpu.vector_store %arg5[%c0_20, %c0_21], %21 {strides = array<i32>} : memref<8x128xf32, #tpu.memory_space<vmem>>, vector<8x128xf32>,
    } else {
    }
    return
  }
  func.func @transform_0(%arg0: i32, %arg1: i32) -> (i32, i32) {
    %c0_i32 = arith.constant 0 : i32
    %c0_i32_0 = arith.constant 0 : i32
    return %arg0, %c0_i32 : i32, i32
  }
  func.func @transform_1(%arg0: i32, %arg1: i32) -> (i32, i32) {
    %c0_i32 = arith.constant 0 : i32
    %c0_i32_0 = arith.constant 0 : i32
    return %arg1, %c0_i32 : i32, i32
  }
  func.func @transform_2(%arg0: i32, %arg1: i32) -> (i32, i32) {
    %c0_i32 = arith.constant 0 : i32
    %c0_i32_0 = arith.constant 0 : i32
    return %c0_i32, %arg1 : i32, i32
  }
  func.func @transform_3(%arg0: i32, %arg1: i32) -> (i32, i32) {
    %c0_i32 = arith.constant 0 : i32
    %c0_i32_0 = arith.constant 0 : i32
    return %arg0, %c0_i32 : i32, i32
  }
  func.func @transform_4(%arg0: i32, %arg1: i32) -> (i32, i32) {
    %c0_i32 = arith.constant 0 : i32
    return %arg0, %arg1 : i32, i32
  }
}

</mosaic_0001>

<llo_original>
// kernel: simple_sae_forward.1
$region0: #{simple_sae_forward.1}
  #allocation0 [shape = 'u32[]', space=smem, size = 0x4, offset = 0x4, fixed_abs, tag = 'smem constant byte address 0x4 - core index']
  #allocation1 [shape = 'u32[72,128]{1,0:T(1,128)}', space=vmem, size = 0x9000, scoped, tag = 'internal scratch']
  #allocation2 [shape = 'f32[8,128]{1,0:T(8,128)}', space=vmem, size = 0x1000, scoped, tag = 'scratch operand']
  %s0 = inlined_call_operand.vmem [shape: bf16[16,128], index: 0, kind: input, shape index: {}]
  %s1 = inlined_call_operand.vmem [shape: bf16[256,128], index: 1, kind: input, shape index: {}]
  %s2 = inlined_call_operand.vmem [shape: f32[1,256], index: 2, kind: input, shape index: {}]
  %s3 = inlined_call_operand.hbm [shape: f32[16,128], index: 3, kind: output, shape index: {0}]
  %s4 = inlined_call_operand.hbm [shape: f32[16,256], index: 4, kind: output, shape index: {1}]
  %5 = xla_tuple %s3, %s4
  %s6 = sld [smem:[#allocation0]]
  $region61: #{simple_sae_forward.1} parent=0
    _
  %s8 = ssub.s32 1, %s6
  %s9 = scalar_select 0, %s8, %s6
  $region1: #{simple_sae_forward.1} parent=0
    #allocation3 [shape = 'u8[8192]{0}', space=vmem, size = 0x2000, scoped, tag = 'output window, operand 0']
    #allocation4 [shape = 's32[2]{0}', space=sflag, size = 0x8, scoped, tag = 'scoped memory for simple_sae_forward.1']
    #allocation5 [shape = 'u8[16384]{0}', space=vmem, size = 0x4000, scoped, tag = 'output window, operand 1']
    #allocation6 [shape = 's32[2]{0}', space=sflag, size = 0x8, scoped, tag = 'scoped memory for simple_sae_forward.1']
    %10 = vsyncpa [#allocation4], 0
    %s11 = scalar_lea.sflag [#allocation4], 1
    %12 = vsyncpa %s11, 0
    %13 = vsyncpa [#allocation6], 0
    %s14 = scalar_lea.sflag [#allocation6], 1
    %15 = vsyncpa %s14, 0
    loop: start=0, step=1, limit=4
    $region2: #{simple_sae_forward.1} parent=1 // loop_pre_header
      _
    $region3: #{simple_sae_forward.1} parent=1 // loop_header
      %s17 = sphi 0, %s21
      %p18 = scmp.ge.s32.totalorder %s17, 4
      %s24 = sphi 0, %s36
      %s25 = sphi 0, %s32
      %s26 = sphi 0, %s24
      %s27 = sphi 0, %s25
      %s28 = sphi 0, %s26
      %s29 = sphi 0, %s27
      %s39 = sphi 0, %s41
      %s42 = sphi 0, %s39
      %s43 = sphi 0, %s42
      %s59 = sphi 0, %s43
      %s65 = sphi 0, %s67
      %s68 = sphi 0, %s65
      %s69 = sphi 0, %s68
      %s85 = sphi 0, %s69
      %s91 = sphi 0, %s93
      %s94 = sphi 0, %s91
      %s95 = sphi 0, %s94
      %s111 = sphi 0, %s95
      %s117 = sphi 0, %s119
      %s120 = sphi 0, %s117
      %s121 = sphi 0, %s120
      %s137 = sphi 0, %s121
      %s145 = sphi 0, %s147
      %s148 = sphi 0, %s145
      %s149 = sphi 0, %s148
      %s165 = sphi 0, %s149
    $region4: #{simple_sae_forward.1} parent=1 // loop_header_branch
      %20 = sbr.rel (%p18) target = $region8
    $region5: #{simple_sae_forward.1} parent=1 // loop_body
      %s22 = ssub.s32 %s17, 1
      %s23 = ssub.s32 %s17, 2
      %s30 = sadd.s32 1, %s25
      %p31 = scmp.ge.s32.totalorder %s30, 1
      %s32 = scalar_select %p31, 0, %s30
      %s33 = sadd.s32 1, %s24
      %s34 = scalar_select %p31, %s33, %s24
      %p35 = scmp.ge.s32.totalorder %s34, 2
      %s36 = scalar_select %p35, 0, %s34
      %s37 = ssub.s32 %s24, %s36
      %p38 = scmp.eq.s32.totalorder %s37, 0
      %s40 = sadd.s32 %s39, 1
      %s41 = scalar_select %p38, %s39, %s40
      %p44 = pneg %p38
      %p45 = scmp.eq.s32.totalorder %s17, 1
      %p46 = por %p44, %p45
      %p47 = scmp.ne.s32.totalorder %s39, %s42
      %p48 = scmp.eq.s32.totalorder %s17, 0
      %p49 = por %p47, %p48
      %p50 = scmp.ne.s32.totalorder %s39, %s42
      %p51 = scmp.eq.s32.totalorder %s22, 1
      %p52 = por %p50, %p51
      %p53 = scmp.ne.s32.totalorder %s42, %s43
      %p54 = scmp.eq.s32.totalorder %s22, 0
      %p55 = por %p53, %p54
      %p56 = scmp.ne.s32.totalorder %s42, %s43
      %p57 = scmp.eq.s32.totalorder %s23, 1
      %p58 = por %p56, %p57
      %p60 = scmp.ne.s32.totalorder %s43, %s59
      %p61 = scmp.eq.s32.totalorder %s23, 0
      %p62 = por %p60, %p61
      %s63 = ssub.s32 %s25, %s32
      %p64 = scmp.eq.s32.totalorder %s63, 0
      %s66 = sadd.s32 %s65, 1
      %s67 = scalar_select %p64, %s65, %s66
      %p70 = pneg %p64
      %p71 = scmp.eq.s32.totalorder %s17, 1
      %p72 = por %p70, %p71
      %p73 = scmp.ne.s32.totalorder %s65, %s68
      %p74 = scmp.eq.s32.totalorder %s17, 0
      %p75 = por %p73, %p74
      %p76 = scmp.ne.s32.totalorder %s65, %s68
      %p77 = scmp.eq.s32.totalorder %s22, 1
      %p78 = por %p76, %p77
      %p79 = scmp.ne.s32.totalorder %s68, %s69
      %p80 = scmp.eq.s32.totalorder %s22, 0
      %p81 = por %p79, %p80
      %p82 = scmp.ne.s32.totalorder %s68, %s69
      %p83 = scmp.eq.s32.totalorder %s23, 1
      %p84 = por %p82, %p83
      %p86 = scmp.ne.s32.totalorder %s69, %s85
      %p87 = scmp.eq.s32.totalorder %s23, 0
      %p88 = por %p86, %p87
      %s89 = ssub.s32 %s25, %s32
      %p90 = scmp.eq.s32.totalorder %s89, 0
      %s92 = sadd.s32 %s91, 1
      %s93 = scalar_select %p90, %s91, %s92
      %p96 = pneg %p90
      %p97 = scmp.eq.s32.totalorder %s17, 1
      %p98 = por %p96, %p97
      %p99 = scmp.ne.s32.totalorder %s91, %s94
      %p100 = scmp.eq.s32.totalorder %s17, 0
      %p101 = por %p99, %p100
      %p102 = scmp.ne.s32.totalorder %s91, %s94
      %p103 = scmp.eq.s32.totalorder %s22, 1
      %p104 = por %p102, %p103
      %p105 = scmp.ne.s32.totalorder %s94, %s95
      %p106 = scmp.eq.s32.totalorder %s22, 0
      %p107 = por %p105, %p106
      %p108 = scmp.ne.s32.totalorder %s94, %s95
      %p109 = scmp.eq.s32.totalorder %s23, 1
      %p110 = por %p108, %p109
      %p112 = scmp.ne.s32.totalorder %s95, %s111
      %p113 = scmp.eq.s32.totalorder %s23, 0
      %p114 = por %p112, %p113
      %s115 = ssub.s32 %s24, %s36
      %p116 = scmp.eq.s32.totalorder %s115, 0
      %s118 = sadd.s32 %s117, 1
      %s119 = scalar_select %p116, %s117, %s118
      %p122 = pneg %p116
      %p123 = scmp.eq.s32.totalorder %s17, 1
      %p124 = por %p122, %p123
      %p125 = scmp.ne.s32.totalorder %s117, %s120
      %p126 = scmp.eq.s32.totalorder %s17, 0
      %p127 = por %p125, %p126
      %p128 = scmp.ne.s32.totalorder %s117, %s120
      %p129 = scmp.eq.s32.totalorder %s22, 1
      %p130 = por %p128, %p129
      %p131 = scmp.ne.s32.totalorder %s120, %s121
      %p132 = scmp.eq.s32.totalorder %s22, 0
      %p133 = por %p131, %p132
      %p134 = scmp.ne.s32.totalorder %s120, %s121
      %p135 = scmp.eq.s32.totalorder %s23, 1
      %p136 = por %p134, %p135
      %p138 = scmp.ne.s32.totalorder %s121, %s137
      %p139 = scmp.eq.s32.totalorder %s23, 0
      %p140 = por %p138, %p139
      %s141 = ssub.s32 %s24, %s36
      %s142 = ssub.s32 %s25, %s32
      %s143 = sor.u32 %s141, %s142
      %p144 = scmp.eq.s32.totalorder %s143, 0
      %s146 = sadd.s32 %s145, 1
      %s147 = scalar_select %p144, %s145, %s146
      %p150 = pneg %p144
      %p151 = scmp.eq.s32.totalorder %s17, 1
      %p152 = por %p150, %p151
      %p153 = scmp.ne.s32.totalorder %s145, %s148
      %p154 = scmp.eq.s32.totalorder %s17, 0
      %p155 = por %p153, %p154
      %p156 = scmp.ne.s32.totalorder %s145, %s148
      %p157 = scmp.eq.s32.totalorder %s22, 1
      %p158 = por %p156, %p157
      %p159 = scmp.ne.s32.totalorder %s148, %s149
      %p160 = scmp.eq.s32.totalorder %s22, 0
      %p161 = por %p159, %p160
      %p162 = scmp.ne.s32.totalorder %s148, %s149
      %p163 = scmp.eq.s32.totalorder %s23, 1
      %p164 = por %p162, %p163
      %p166 = scmp.ne.s32.totalorder %s149, %s165
      %p167 = scmp.eq.s32.totalorder %s23, 0
      %p168 = por %p166, %p167
      %p169 = scmp.le.s32.totalorder 1, %s17
      %p170 = scmp.lt.s32.totalorder %s17, 3
      %p171 = pnand %p169, %p170
      %p172 = pneg %p171
      // Predicated region
      $region9: #{simple_sae_forward.1} parent=5 // pred_check
        _
      $region10: #{simple_sae_forward.1} parent=5 // pred_check_branch
        %174 = sbr.rel (%p171) target = $region12
      $region11: #{simple_sae_forward.1} parent=5 // pred_region
        %s175 = ssub.s32 %s17, 1
        // Predicated region
        $region13: #{simple_sae_forward.1} parent=11 // pred_check
          %p176 = pneg %p81
        $region14: #{simple_sae_forward.1} parent=11 // pred_check_branch
          %178 = sbr.rel (%p176) target = $region16
        $region15: #{simple_sae_forward.1} parent=11 // pred_region
          %s179 = smul.u32 32, %s27
          %p180 = scmp.lt.s32.totalorder %s179, 31
          %s181 = scalar_select %p180, %s179, 31
          %s182 = smul.addr %s181, 4
          %s183 = scalar_lea.vmem %s1, %s182
          %s184 = smul.u32 32, %s27
        $region16: #{simple_sae_forward.1} parent=11 // pred_fallthru
          _
        // Predicated region
        $region17: #{simple_sae_forward.1} parent=11 // pred_check
          %p185 = pneg %p107
        $region18: #{simple_sae_forward.1} parent=11 // pred_check_branch
          %187 = sbr.rel (%p185) target = $region20
        $region19: #{simple_sae_forward.1} parent=11 // pred_region
          %s188 = smul.u32 2, %s27
          %p189 = scmp.lt.s32.totalorder %s188, 1
          %s190 = scalar_select %p189, %s188, 1
          %s191 = scalar_lea.vmem %s2, %s190
          %s192 = smul.u32 2, %s27
        $region20: #{simple_sae_forward.1} parent=11 // pred_fallthru
          _
      $region12: #{simple_sae_forward.1} parent=5 // pred_fallthru
        _
      %p193 = scmp.lt.s32.totalorder %s17, 2
      // Predicated region
      $region21: #{simple_sae_forward.1} parent=5 // pred_check
        %p194 = pneg %p193
      $region22: #{simple_sae_forward.1} parent=5 // pred_check_branch
        %196 = sbr.rel (%p194) target = $region24
      $region23: #{simple_sae_forward.1} parent=5 // pred_region
        // Predicated region
        $region25: #{simple_sae_forward.1} parent=23 // pred_check
          %p197 = pneg %p49
        $region26: #{simple_sae_forward.1} parent=23 // pred_check_branch
          %199 = sbr.rel (%p197) target = $region28
        $region27: #{simple_sae_forward.1} parent=23 // pred_region
          %p200 = scmp.lt.s32.totalorder %s24, 1
          %s201 = scalar_select %p200, %s24, 1
          %s202 = smul.addr %s201, 4
          %s203 = scalar_lea.vmem %s0, %s202
        $region28: #{simple_sae_forward.1} parent=23 // pred_fallthru
          _
      $region24: #{simple_sae_forward.1} parent=5 // pred_fallthru
        _
      %p204 = scmp.le.s32.totalorder 1, %s17
      %p205 = scmp.lt.s32.totalorder %s17, 3
      %p206 = pnand %p204, %p205
      %p207 = pneg %p206
      // Predicated region
      $region29: #{simple_sae_forward.1} parent=5 // pred_check
        _
      $region30: #{simple_sae_forward.1} parent=5 // pred_check_branch
        %209 = sbr.rel (%p206) target = $region32
      $region31: #{simple_sae_forward.1} parent=5 // pred_region
        %s210 = ssub.s32 %s17, 1
        %p211 = scmp.lt.s32.totalorder %s26, 1
        %s212 = scalar_select %p211, %s26, 1
        %s213 = smul.addr %s212, 4
        %s214 = scalar_lea.vmem %s0, %s213
        %p215 = pneg %p55
        %p216 = pneg %p52
        %s217 = smul.u32 32, %s27
        %p218 = scmp.lt.s32.totalorder %s217, 31
        %s219 = scalar_select %p218, %s217, 31
        %s220 = smul.addr %s219, 4
        %s221 = scalar_lea.vmem %s1, %s220
        %p222 = pneg %p81
        %p223 = pneg %p78
        %s224 = smul.u32 2, %s27
        %p225 = scmp.lt.s32.totalorder %s224, 1
        %s226 = scalar_select %p225, %s224, 1
        %s227 = scalar_lea.vmem %s2, %s226
        %p228 = pneg %p107
        %p229 = pneg %p104
        %p230 = pneg %p133
        %p231 = pneg %p130
        %s232 = sand.u32 %s120, 1
        %s233 = scalar_lea.sflag [#allocation4], %s232
        %s234 = sand.u32 %s120, 1
        %s235 = smul.addr %s234, 8
        %s236 = scalar_lea.vmem [#allocation3], %s235
        %p237 = pneg %p161
        %p238 = pneg %p158
        %s239 = sand.u32 %s148, 1
        %s240 = scalar_lea.sflag [#allocation6], %s239
        %s241 = sand.u32 %s148, 1
        %s242 = smul.addr %s241, 16
        %s243 = scalar_lea.vmem [#allocation5], %s242
        %p244 = scmp.lt.s32.totalorder %s26, 1
        %s245 = scalar_select %p244, %s26, 1
        %s246 = smul.addr %s245, 4
        %s247 = scalar_lea.vmem %s0, %s246
        %s248 = smul.u32 32, %s27
        %p249 = scmp.lt.s32.totalorder %s248, 31
        %s250 = scalar_select %p249, %s248, 31
        %s251 = smul.addr %s250, 4
        %s252 = scalar_lea.vmem %s1, %s251
        %s253 = smul.u32 32, %s27
        %s254 = smul.u32 2, %s27
        %p255 = scmp.lt.s32.totalorder %s254, 1
        %s256 = scalar_select %p255, %s254, 1
        %s257 = scalar_lea.vmem %s2, %s256
        %s258 = smul.u32 2, %s27
        %s259 = smul.u32 2, %s27
        %p260 = scmp.eq.s32.totalorder %s27, 0
        // Predicated region
        $region33: #{simple_sae_forward.1} parent=31 // pred_check
          %p261 = pneg %p260
        $region34: #{simple_sae_forward.1} parent=31 // pred_check_branch
          %263 = sbr.rel (%p261) target = $region36
        $region35: #{simple_sae_forward.1} parent=31 // pred_region
          %264 = vst [vmem:[#allocation2] sm:$0xff] 0.0
        $region36: #{simple_sae_forward.1} parent=31 // pred_fallthru
          _
        %v265 = vld [vmem:[%s247] sm:$0xf]
        %v266 = vld [vmem:[%s252] sm:$0xf]
        %v267 = vld [vmem:[%s252 + $0x4] sm:$0xf]
        %v268 = vld [vmem:[%s252 + $0x8] sm:$0xf]
        %v269 = vld [vmem:[%s252 + $0xc] sm:$0xf]
        %v270 = vld [vmem:[%s252 + $0x10] sm:$0xf]
        %v271 = vld [vmem:[%s252 + $0x14] sm:$0xf]
        %v272 = vld [vmem:[%s252 + $0x18] sm:$0xf]
        %v273 = vld [vmem:[%s252 + $0x1c] sm:$0xf]
        %v274 = vld [vmem:[%s252 + $0x20] sm:$0xf]
        %v275 = vld [vmem:[%s252 + $0x24] sm:$0xf]
        %v276 = vld [vmem:[%s252 + $0x28] sm:$0xf]
        %v277 = vld [vmem:[%s252 + $0x2c] sm:$0xf]
        %v278 = vld [vmem:[%s252 + $0x30] sm:$0xf]
        %v279 = vld [vmem:[%s252 + $0x34] sm:$0xf]
        %v280 = vld [vmem:[%s252 + $0x38] sm:$0xf]
        %v281 = vld [vmem:[%s252 + $0x3c] sm:$0xf]
        %v282 = vld [vmem:[%s252 + $0x40] sm:$0xf]
        %v283 = vld [vmem:[%s252 + $0x44] sm:$0xf]
        %v284 = vld [vmem:[%s252 + $0x48] sm:$0xf]
        %v285 = vld [vmem:[%s252 + $0x4c] sm:$0xf]
        %v286 = vld [vmem:[%s252 + $0x50] sm:$0xf]
        %v287 = vld [vmem:[%s252 + $0x54] sm:$0xf]
        %v288 = vld [vmem:[%s252 + $0x58] sm:$0xf]
        %v289 = vld [vmem:[%s252 + $0x5c] sm:$0xf]
        %v290 = vld [vmem:[%s252 + $0x60] sm:$0xf]
        %v291 = vld [vmem:[%s252 + $0x64] sm:$0xf]
        %v292 = vld [vmem:[%s252 + $0x68] sm:$0xf]
        %v293 = vld [vmem:[%s252 + $0x6c] sm:$0xf]
        %v294 = vld [vmem:[%s252 + $0x70] sm:$0xf]
        %v295 = vld [vmem:[%s252 + $0x74] sm:$0xf]
        %v296 = vld [vmem:[%s252 + $0x78] sm:$0xf]
        %v297 = vld [vmem:[%s252 + $0x7c] sm:$0xf]
        %v298 = vld [vmem:[%s257] sm:$0x3]
        %v300 = vperm.slane %v298, 0
        %v301 = vperm.slane %v298, 1
        %v336 = vunpack.c.l.b16 %v266
        %v337 = vunpack.c.l.b16 %v267
        %v338 = vunpack.c.l.b16 %v268
        %v339 = vunpack.c.l.b16 %v269
        %v340 = vunpack.c.l.b16 %v270
        %v341 = vunpack.c.l.b16 %v271
        %v342 = vunpack.c.l.b16 %v272
        %v343 = vunpack.c.l.b16 %v273
        %v344 = vunpack.c.l.b16 %v274
        %v345 = vunpack.c.l.b16 %v275
        %v346 = vunpack.c.l.b16 %v276
        %v347 = vunpack.c.l.b16 %v277
        %v348 = vunpack.c.l.b16 %v278
        %v349 = vunpack.c.l.b16 %v279
        %v350 = vunpack.c.l.b16 %v280
        %v351 = vunpack.c.l.b16 %v281
        %v352 = vunpack.c.l.b16 %v282
        %v353 = vunpack.c.l.b16 %v283
        %v354 = vunpack.c.l.b16 %v284
        %v355 = vunpack.c.l.b16 %v285
        %v356 = vunpack.c.l.b16 %v286
        %v357 = vunpack.c.l.b16 %v287
        %v358 = vunpack.c.l.b16 %v288
        %v359 = vunpack.c.l.b16 %v289
        %v360 = vunpack.c.l.b16 %v290
        %v361 = vunpack.c.l.b16 %v291
        %v362 = vunpack.c.l.b16 %v292
        %v363 = vunpack.c.l.b16 %v293
        %v364 = vunpack.c.l.b16 %v294
        %v365 = vunpack.c.l.b16 %v295
        %v366 = vunpack.c.l.b16 %v296
        %v367 = vunpack.c.l.b16 %v297
        %v368 = vpack.c.b16 %v337, %v336
        %v369 = vpack.c.b16 %v339, %v338
        %v370 = vpack.c.b16 %v341, %v340
        %v371 = vpack.c.b16 %v343, %v342
        %v372 = vpack.c.b16 %v345, %v344
        %v373 = vpack.c.b16 %v347, %v346
        %v374 = vpack.c.b16 %v349, %v348
        %v375 = vpack.c.b16 %v351, %v350
        %v376 = vpack.c.b16 %v353, %v352
        %v377 = vpack.c.b16 %v355, %v354
        %v378 = vpack.c.b16 %v357, %v356
        %v379 = vpack.c.b16 %v359, %v358
        %v380 = vpack.c.b16 %v361, %v360
        %v381 = vpack.c.b16 %v363, %v362
        %v382 = vpack.c.b16 %v365, %v364
        %v383 = vpack.c.b16 %v367, %v366
        %400 = vmatpush.bf16.xpose.msra.mxu0 %v375
        %401 = vmatpush.bf16.xpose.msra.mxu0 %v374
        %402 = vmatpush.bf16.xpose.msra.mxu0 %v373
        %403 = vmatpush.bf16.xpose.msra.mxu0 %v372
        %404 = vmatpush.bf16.xpose.msra.mxu0 %v371
        %405 = vmatpush.bf16.xpose.msra.mxu0 %v370
        %406 = vmatpush.bf16.xpose.msra.mxu0 %v369
        %407 = vmatpush.bf16.xpose.msra.mxu0 %v368
        %408 = vmatmul.bf16.gmra.mxu0 %v265
        %v409 = vpop.f32.mrf.mxu0
        %v410 = vadd.f32 %v300, %v409
        %v411 = vpop.f32.mrf.mxu0
        %412 = vdwg.mxu0
        %413 = vmatpush.bf16.xpose.msra.mxu0 %v383
        %414 = vmatpush.bf16.xpose.msra.mxu0 %v382
        %415 = vmatpush.bf16.xpose.msra.mxu0 %v381
        %416 = vmatpush.bf16.xpose.msra.mxu0 %v380
        %417 = vmatpush.bf16.xpose.msra.mxu0 %v379
        %418 = vmatpush.bf16.xpose.msra.mxu0 %v378
        %419 = vmatpush.bf16.xpose.msra.mxu0 %v377
        %420 = vmatpush.bf16.xpose.msra.mxu0 %v376
        %421 = vmatmul.bf16.gmra.mxu0 %v265
        %v422 = vpop.f32.mrf.mxu0
        %v423 = vadd.f32 %v301, %v422
        %v424 = vpop.f32.mrf.mxu0
        %425 = vdwg.mxu0
        %v426 = vmax.f32 %v410, 0.0
        %v427 = vmax.f32 %v423, 0.0
        %428 = vst [vmem:[%s243] sm:$0xff] %v426
        %429 = vst [vmem:[%s243 + $0x8] sm:$0xff] %v427
        %v430 = vld [vmem:[#allocation2] sm:$0xff]
        %v431 = vpack.c.bf16 %v426, %v426
        %v432 = vpack.c.bf16 %v427, %v427
        %v433 = vld [vmem:[%s252] sm:$0xf]
        %v434 = vld [vmem:[%s252 + $0x4] sm:$0xf]
        %v435 = vld [vmem:[%s252 + $0x8] sm:$0xf]
        %v436 = vld [vmem:[%s252 + $0xc] sm:$0xf]
        %v437 = vld [vmem:[%s252 + $0x10] sm:$0xf]
        %v438 = vld [vmem:[%s252 + $0x14] sm:$0xf]
        %v439 = vld [vmem:[%s252 + $0x18] sm:$0xf]
        %v440 = vld [vmem:[%s252 + $0x1c] sm:$0xf]
        %v441 = vld [vmem:[%s252 + $0x20] sm:$0xf]
        %v442 = vld [vmem:[%s252 + $0x24] sm:$0xf]
        %v443 = vld [vmem:[%s252 + $0x28] sm:$0xf]
        %v444 = vld [vmem:[%s252 + $0x2c] sm:$0xf]
        %v445 = vld [vmem:[%s252 + $0x30] sm:$0xf]
        %v446 = vld [vmem:[%s252 + $0x34] sm:$0xf]
        %v447 = vld [vmem:[%s252 + $0x38] sm:$0xf]
        %v448 = vld [vmem:[%s252 + $0x3c] sm:$0xf]
        %v449 = vld [vmem:[%s252 + $0x40] sm:$0xf]
        %v450 = vld [vmem:[%s252 + $0x44] sm:$0xf]
        %v451 = vld [vmem:[%s252 + $0x48] sm:$0xf]
        %v452 = vld [vmem:[%s252 + $0x4c] sm:$0xf]
        %v453 = vld [vmem:[%s252 + $0x50] sm:$0xf]
        %v454 = vld [vmem:[%s252 + $0x54] sm:$0xf]
        %v455 = vld [vmem:[%s252 + $0x58] sm:$0xf]
        %v456 = vld [vmem:[%s252 + $0x5c] sm:$0xf]
        %v457 = vld [vmem:[%s252 + $0x60] sm:$0xf]
        %v458 = vld [vmem:[%s252 + $0x64] sm:$0xf]
        %v459 = vld [vmem:[%s252 + $0x68] sm:$0xf]
        %v460 = vld [vmem:[%s252 + $0x6c] sm:$0xf]
        %v461 = vld [vmem:[%s252 + $0x70] sm:$0xf]
        %v462 = vld [vmem:[%s252 + $0x74] sm:$0xf]
        %v463 = vld [vmem:[%s252 + $0x78] sm:$0xf]
        %v464 = vld [vmem:[%s252 + $0x7c] sm:$0xf]
        %v497 = vunpack.c.l.b16 %v433
        %v498 = vunpack.c.l.b16 %v434
        %v499 = vunpack.c.l.b16 %v435
        %v500 = vunpack.c.l.b16 %v436
        %v501 = vunpack.c.l.b16 %v437
        %v502 = vunpack.c.l.b16 %v438
        %v503 = vunpack.c.l.b16 %v439
        %v504 = vunpack.c.l.b16 %v440
        %v505 = vunpack.c.l.b16 %v441
        %v506 = vunpack.c.l.b16 %v442
        %v507 = vunpack.c.l.b16 %v443
        %v508 = vunpack.c.l.b16 %v444
        %v509 = vunpack.c.l.b16 %v445
        %v510 = vunpack.c.l.b16 %v446
        %v511 = vunpack.c.l.b16 %v447
        %v512 = vunpack.c.l.b16 %v448
        %v513 = vunpack.c.l.b16 %v449
        %v514 = vunpack.c.l.b16 %v450
        %v515 = vunpack.c.l.b16 %v451
        %v516 = vunpack.c.l.b16 %v452
        %v517 = vunpack.c.l.b16 %v453
        %v518 = vunpack.c.l.b16 %v454
        %v519 = vunpack.c.l.b16 %v455
        %v520 = vunpack.c.l.b16 %v456
        %v521 = vunpack.c.l.b16 %v457
        %v522 = vunpack.c.l.b16 %v458
        %v523 = vunpack.c.l.b16 %v459
        %v524 = vunpack.c.l.b16 %v460
        %v525 = vunpack.c.l.b16 %v461
        %v526 = vunpack.c.l.b16 %v462
        %v527 = vunpack.c.l.b16 %v463
        %v528 = vunpack.c.l.b16 %v464
        %v529 = vpack.c.b16 %v498, %v497
        %v530 = vpack.c.b16 %v500, %v499
        %v531 = vpack.c.b16 %v502, %v501
        %v532 = vpack.c.b16 %v504, %v503
        %v533 = vpack.c.b16 %v506, %v505
        %v534 = vpack.c.b16 %v508, %v507
        %v535 = vpack.c.b16 %v510, %v509
        %v536 = vpack.c.b16 %v512, %v511
        %v537 = vpack.c.b16 %v514, %v513
        %v538 = vpack.c.b16 %v516, %v515
        %v539 = vpack.c.b16 %v518, %v517
        %v540 = vpack.c.b16 %v520, %v519
        %v541 = vpack.c.b16 %v522, %v521
        %v542 = vpack.c.b16 %v524, %v523
        %v543 = vpack.c.b16 %v526, %v525
        %v544 = vpack.c.b16 %v528, %v527
        %561 = vmatpush.bf16.msra.mxu0 %v536
        %562 = vmatpush.bf16.msra.mxu0 %v535
        %563 = vmatpush.bf16.msra.mxu0 %v534
        %564 = vmatpush.bf16.msra.mxu0 %v533
        %565 = vmatpush.bf16.msra.mxu0 %v532
        %566 = vmatpush.bf16.msra.mxu0 %v531
        %567 = vmatpush.bf16.msra.mxu0 %v530
        %568 = vmatpush.bf16.msra.mxu0 %v529
        %569 = vmatmul.bf16.gmra.mxu0 %v431
        %v570 = vpop.f32.mrf.mxu0
        %v571 = vadd.f32 0.0, %v570
        %v572 = vpop.f32.mrf.mxu0
        %573 = vdwg.mxu0
        %574 = vmatpush.bf16.msra.mxu0 %v544
        %575 = vmatpush.bf16.msra.mxu0 %v543
        %576 = vmatpush.bf16.msra.mxu0 %v542
        %577 = vmatpush.bf16.msra.mxu0 %v541
        %578 = vmatpush.bf16.msra.mxu0 %v540
        %579 = vmatpush.bf16.msra.mxu0 %v539
        %580 = vmatpush.bf16.msra.mxu0 %v538
        %581 = vmatpush.bf16.msra.mxu0 %v537
        %582 = vmatmul.bf16.gmra.mxu0 %v432
        %v583 = vpop.f32.mrf.mxu0
        %v584 = vadd.f32 %v571, %v583
        %v585 = vpop.f32.mrf.mxu0
        %586 = vdwg.mxu0
        %v587 = vadd.f32 %v430, %v584
        %588 = vst [vmem:[#allocation2] sm:$0xff] %v587
        // Predicated region
        $region37: #{simple_sae_forward.1} parent=31 // pred_check
          %p589 = pneg %p260
        $region38: #{simple_sae_forward.1} parent=31 // pred_check_branch
          %591 = sbr.rel (%p589) target = $region40
        $region39: #{simple_sae_forward.1} parent=31 // pred_region
          %v592 = vld [vmem:[#allocation2] sm:$0xff]
          %593 = vst [vmem:[%s236] sm:$0xff] %v592
        $region40: #{simple_sae_forward.1} parent=31 // pred_fallthru
          _
        %s594 = sand.u32 %s120, 1
        %s595 = scalar_lea.sflag [#allocation4], %s594
        %s596 = sand.u32 %s120, 1
        %s597 = smul.addr %s596, 8
        %s598 = scalar_lea.vmem [#allocation3], %s597
        %s599 = sand.u32 %s148, 1
        %s600 = scalar_lea.sflag [#allocation6], %s599
        %s601 = sand.u32 %s148, 1
        %s602 = smul.addr %s601, 16
        %s603 = scalar_lea.vmem [#allocation5], %s602
        // Predicated region
        $region41: #{simple_sae_forward.1} parent=31 // pred_check
          %p604 = pneg %p130
        $region42: #{simple_sae_forward.1} parent=31 // pred_check_branch
          %606 = sbr.rel (%p604) target = $region44
        $region43: #{simple_sae_forward.1} parent=31 // pred_region
          %608 = vsyncadd %s595, 0
          %s609 = smul.addr %s26, 8
          %s610 = scalar_lea.hbm %s3, %s609
          %s612 = sshll.u32 %s598, 4
          %s613 = int_to_ptr.vmem [resolvable:$true] %s612
          %s614 = sshll.u32 %s610, 4
          %s615 = int_to_ptr.hbm [resolvable:$true] %s614
          %617 = dma.vmem_to_hbm [thread:$0]  %s613, 128, %s615, %s595
        $region44: #{simple_sae_forward.1} parent=31 // pred_fallthru
          _
        // Predicated region
        $region45: #{simple_sae_forward.1} parent=31 // pred_check
          %p618 = pneg %p158
        $region46: #{simple_sae_forward.1} parent=31 // pred_check_branch
          %620 = sbr.rel (%p618) target = $region48
        $region47: #{simple_sae_forward.1} parent=31 // pred_region
          %s621 = smul.u32 2, %s27
          %623 = vsyncadd %s600, 0
          %s624 = smul.addr %s26, 2
          %s625 = sadd.s32 %s621, %s624
          %s626 = smul.addr %s625, 8
          %s627 = scalar_lea.hbm %s4, %s626
          %s629 = sshll.u32 %s603, 4
          %s630 = int_to_ptr.vmem [resolvable:$true] %s629
          %s631 = sshll.u32 %s627, 4
          %s632 = int_to_ptr.hbm [resolvable:$true] %s631
          %634 = dma.vmem_to_hbm [thread:$0]  %s630, 256, %s632, %s600
        $region48: #{simple_sae_forward.1} parent=31 // pred_fallthru
          _
      $region32: #{simple_sae_forward.1} parent=5 // pred_fallthru
        _
      %p635 = scmp.le.s32.totalorder 2, %s17
      // Predicated region
      $region49: #{simple_sae_forward.1} parent=5 // pred_check
        %p636 = pneg %p635
      $region50: #{simple_sae_forward.1} parent=5 // pred_check_branch
        %638 = sbr.rel (%p636) target = $region52
      $region51: #{simple_sae_forward.1} parent=5 // pred_region
        %s639 = ssub.s32 %s17, 2
        // Predicated region
        $region53: #{simple_sae_forward.1} parent=51 // pred_check
          %p640 = pneg %p136
        $region54: #{simple_sae_forward.1} parent=51 // pred_check_branch
          %642 = sbr.rel (%p640) target = $region56
        $region55: #{simple_sae_forward.1} parent=51 // pred_region
          %s643 = sand.u32 %s121, 1
          %s644 = scalar_lea.sflag [#allocation4], %s643
          %s645 = sand.u32 %s121, 1
          %s646 = smul.addr %s645, 8
          %s647 = scalar_lea.vmem [#allocation3], %s646
          %649 = dma.done %s644, 128
        $region56: #{simple_sae_forward.1} parent=51 // pred_fallthru
          _
        // Predicated region
        $region57: #{simple_sae_forward.1} parent=51 // pred_check
          %p650 = pneg %p164
        $region58: #{simple_sae_forward.1} parent=51 // pred_check_branch
          %652 = sbr.rel (%p650) target = $region60
        $region59: #{simple_sae_forward.1} parent=51 // pred_region
          %s653 = sand.u32 %s149, 1
          %s654 = scalar_lea.sflag [#allocation6], %s653
          %s655 = sand.u32 %s149, 1
          %s656 = smul.addr %s655, 16
          %s657 = scalar_lea.vmem [#allocation5], %s656
          %659 = dma.done %s654, 256
        $region60: #{simple_sae_forward.1} parent=51 // pred_fallthru
          _
      $region52: #{simple_sae_forward.1} parent=5 // pred_fallthru
        _
    $region6: #{simple_sae_forward.1} parent=1 // loop_footer
      %s21 = sadd.s32 1, %s17
    $region7: #{simple_sae_forward.1} parent=1 // loop_footer_branch
      %16 = sbr.rel target = $region3
    $region8: #{simple_sae_forward.1} parent=1 // loop_exit
      _
    %660 = vsyncpa [#allocation4], 1
    %s661 = scalar_lea.sflag [#allocation4], 1
    %662 = vsyncpa %s661, 1
    %663 = vsyncpa [#allocation6], 1
    %s664 = scalar_lea.sflag [#allocation6], 1
    %665 = vsyncpa %s664, 1

</llo_original>
